<compile_context>
chip_gen: v5e
topology: v5e:2x2
jax: 0.10.0
libtpu: 0.0.40
codegen_flags: <defaults>
</compile_context>

<pallas_src>
import functools

import jax
import jax.numpy as jnp
from jax.experimental import pallas as pl
from jax.experimental.pallas import tpu as pltpu


def _barlow_twins_kernel(y1_ref, y2_ref, w1_ref, b1_ref, w2_ref, b2_ref,
                         scalars_ref, z1_ref, z2_ref, *, lambd, bn_eps):
    n = y1_ref.shape[0]
    inv_n = 1.0 / float(n)

    def batchnorm(x):
        # BatchNorm1d training-mode forward (batch statistics), one pass:
        # var = E[x^2] - mean^2 in f32 (stable enough with eps=1e-5).
        mean = jnp.mean(x, axis=0, keepdims=True)
        ex2 = jnp.mean(x * x, axis=0, keepdims=True)
        var = jnp.maximum(ex2 - mean * mean, 0.0)
        return (x - mean) * jax.lax.rsqrt(var + bn_eps)

    # ---- fused projector: one (2N,L)@(L,Hp) and one (2N,Hp)@(Hp,P) pass ----
    y = jnp.concatenate([y1_ref[...], y2_ref[...]], axis=0).astype(jnp.bfloat16)
    x = jnp.dot(y, w1_ref[...], preferred_element_type=jnp.float32)
    x = x + b1_ref[...]                                     # (2N, Hp) f32

    # BatchNorm statistics must stay per view (two projector calls in the
    # reference), so split, normalize + ReLU per half, then restack.
    h1 = jnp.maximum(batchnorm(x[:n]), 0.0)
    h2 = jnp.maximum(batchnorm(x[n:]), 0.0)
    h = jnp.concatenate([h1, h2], axis=0).astype(jnp.bfloat16)

    z = jnp.dot(h, w2_ref[...], preferred_element_type=jnp.float32)
    z = z + b2_ref[...]                                     # (2N, P) f32

    z1 = z[:n]
    z2 = z[n:]
    z1_ref[...] = z1.astype(z1_ref.dtype)
    z2_ref[...] = z2.astype(z2_ref.dtype)

    # Outer BatchNorm (affine=False), then the cross-correlation on the MXU
    # with bf16 operands / f32 accumulation, contracting the batch axis.
    zn1 = batchnorm(z1).astype(jnp.bfloat16)
    zn2 = batchnorm(z2).astype(jnp.bfloat16)
    c = jax.lax.dot_general(zn1, zn2, (((0,), (0,)), ((), ())),
                            preferred_element_type=jnp.float32) * inv_n  # (P,P)

    # diag / off-diag pulled straight out of c => single accumulation path.
    row = jax.lax.broadcasted_iota(jnp.int32, c.shape, 0)
    col = jax.lax.broadcasted_iota(jnp.int32, c.shape, 1)
    is_diag = row == col
    on_diag = jnp.sum(jnp.where(is_diag, (c - 1.0) ** 2, 0.0))
    off_diag = jnp.sum(jnp.where(is_diag, 0.0, c * c))

    scalars_ref[0] = on_diag + lambd * off_diag
    scalars_ref[1] = on_diag
    scalars_ref[2] = lambd * off_diag


class BarlowTwinsLossPallas:
    """Pallas/JAX port of models/losses.py::BarlowTwinsLoss."""

    BN_EPS = 1e-5

    def __init__(self, lambd, latent_size, proj_size, key=None):
        self.lambd = float(lambd)
        self.latent_size = int(latent_size)
        self.hidden_size = int(latent_size) // 2
        self.proj_size = int(proj_size)
        # Pad the hidden width to a multiple of 128 (>= 128) so both MXU passes
        # see a full-width N / K dimension.  Padded channels have zero weights
        # and bias, so BatchNorm/ReLU keep them exactly zero and the zero rows
        # of W2 leave the output unchanged.
        self.hidden_pad = max(128, -(-self.hidden_size // 128) * 128)

        if key is None:
            key = jax.random.PRNGKey(0)
        k1, k2, k3, k4 = jax.random.split(key, 4)
        L, H, Hp, P = (self.latent_size, self.hidden_size,
                       self.hidden_pad, self.proj_size)

        # nn.Linear default init: U(-1/sqrt(fan_in), 1/sqrt(fan_in)).
        bound1 = 1.0 / (L ** 0.5)
        bound2 = 1.0 / (H ** 0.5)
        w1 = jax.random.uniform(k1, (L, H), jnp.float32, -bound1, bound1)
        b1 = jax.random.uniform(k2, (H,), jnp.float32, -bound1, bound1)
        w2 = jax.random.uniform(k3, (H, P), jnp.float32, -bound2, bound2)
        b2 = jax.random.uniform(k4, (P,), jnp.float32, -bound2, bound2)

        # Weights stored pre-transposed (in, out), zero-padded, and pre-cast to
        # bf16 once so the kernel consumes native MXU operands with no per-call
        # transpose / cast and half the weight DMA bytes.  Biases stay f32.
        self.w1 = (jnp.zeros((L, Hp), jnp.float32).at[:, :H].set(w1)
                   .astype(jnp.bfloat16))
        self.b1 = jnp.zeros((1, Hp), jnp.float32).at[:, :H].set(b1)
        self.w2 = (jnp.zeros((Hp, P), jnp.float32).at[:H, :].set(w2)
                   .astype(jnp.bfloat16))
        self.b2 = b2.reshape(1, P)

    def __call__(self, y1, y2):
        n = y1.shape[0]
        L, Hp, P = self.latent_size, self.hidden_pad, self.proj_size

        kernel = functools.partial(
            _barlow_twins_kernel, lambd=self.lambd, bn_eps=self.BN_EPS)

        vmem = pl.BlockSpec(memory_space=pltpu.MemorySpace.VMEM)
        smem = pl.BlockSpec(memory_space=pltpu.MemorySpace.SMEM)

        in_bytes = jnp.dtype(y1.dtype).itemsize
        cost = pl.CostEstimate(
            flops=2 * (2 * n) * L * Hp + 2 * (2 * n) * Hp * P + 2 * n * P * P,
            transcendentals=2 * (Hp + P),                    # rsqrt per channel
            bytes_accessed=(in_bytes * 2 * n * L             # y1, y2
                            + 2 * (L * Hp + Hp * P)          # bf16 weights
                            + 4 * (Hp + P)                   # biases
                            + 4 * 2 * n * P                  # z1, z2 write-back
                            + 12),                           # scalars
        )

        # VMEM limit sized from the actual resident set (inputs, weights,
        # z outputs and the x/h/z/zn/c intermediates) with 2x headroom.
        resident = (in_bytes * 2 * n * L                     # y1, y2
                    + 2 * (L * Hp + Hp * P)                  # bf16 weights
                    + 4 * (Hp + P)                           # biases
                    + 4 * 2 * n * P                          # z1, z2 outputs
                    + 4 * (2 * n * Hp + 2 * n * P            # x, z
                           + 2 * n * P + P * P))             # zn1+zn2, c
        vmem_limit = int(min(100 * 2**20, max(4 * 2**20, 2 * resident)))

        scalars, z1, z2 = pl.pallas_call(
            kernel,
            out_shape=(
                jax.ShapeDtypeStruct((3,), jnp.float32),     # loss, on, lambd*off
                jax.ShapeDtypeStruct((n, P), jnp.float32),   # z1
                jax.ShapeDtypeStruct((n, P), jnp.float32),   # z2
            ),
            in_specs=[vmem] * 6,
            out_specs=(smem, vmem, vmem),
            compiler_params=pltpu.CompilerParams(vmem_limit_bytes=vmem_limit),
            cost_estimate=cost,
        )(y1, y2, self.w1, self.b1, self.w2, self.b2)

        return scalars[0], scalars[1], scalars[2], z1, z2


if __name__ == "__main__":
    batch = 8
    latent_size = 128      # hidden = 64 -> zero-padded to 128 for the MXU
    proj_size = 128
    lambd = 5e-3

    key = jax.random.PRNGKey(0)
    ky1, ky2, kp = jax.random.split(key, 3)
    y1 = jax.random.normal(ky1, (batch, latent_size), jnp.float32)
    y2 = jax.random.normal(ky2, (batch, latent_size), jnp.float32)

    loss_mod = BarlowTwinsLossPallas(lambd, latent_size, proj_size, key=kp)
    loss, on_diag, off_diag_w, z1, z2 = loss_mod(y1, y2)
    jax.block_until_ready((loss, on_diag, off_diag_w, z1, z2))
    print("KERNEL_OK")
</pallas_src>

<mosaic_0001>
module attributes {stable_mosaic.version = 11 : i64} {
  func.func @_barlow_twins_kernel(%arg0: memref<8x128xf32, #tpu.memory_space<vmem>>, %arg1: memref<8x128xf32, #tpu.memory_space<vmem>>, %arg2: memref<128x128xbf16, #tpu.memory_space<vmem>>, %arg3: memref<1x128xf32, #tpu.memory_space<vmem>>, %arg4: memref<128x128xbf16, #tpu.memory_space<vmem>>, %arg5: memref<1x128xf32, #tpu.memory_space<vmem>>, %arg6: memref<3xf32, #tpu.memory_space<smem>>, %arg7: memref<8x128xf32, #tpu.memory_space<vmem>>, %arg8: memref<8x128xf32, #tpu.memory_space<vmem>>) attributes {dimension_semantics = [], scalar_prefetch = 0 : i64, scratch_operands = 0 : i64, tpu.core_type = #tpu.core_type<tc>} {
    %c0 = arith.constant 0 : index
    %c0_0 = arith.constant 0 : index
    %0 = vector.load %arg0[%c0, %c0_0] : memref<8x128xf32, #tpu.memory_space<vmem>>, vector<8x128xf32>
    %c0_1 = arith.constant 0 : index
    %c0_2 = arith.constant 0 : index
    %1 = vector.load %arg1[%c0_1, %c0_2] : memref<8x128xf32, #tpu.memory_space<vmem>>, vector<8x128xf32>
    %2 = tpu.concatenate %0, %1 in 0 : vector<8x128xf32>, vector<8x128xf32> -> vector<16x128xf32>
    %3 = arith.truncf %2 : vector<16x128xf32> to vector<16x128xbf16>
    %c0_3 = arith.constant 0 : index
    %c0_4 = arith.constant 0 : index
    %4 = vector.load %arg2[%c0_3, %c0_4] : memref<128x128xbf16, #tpu.memory_space<vmem>>, vector<128x128xbf16>
    %cst = arith.constant dense<0.000000e+00> : vector<16x128xf32>
    %5 = tpu.matmul %3, %4, %cst {dimension_numbers = #tpu.dot_dimension_numbers<[1], [0], [0], [1], [0, 0, 1, 1], [], []>} : vector<16x128xbf16>, vector<128x128xbf16>, vector<16x128xf32> -> vector<16x128xf32>
    %c0_5 = arith.constant 0 : index
    %c0_6 = arith.constant 0 : index
    %6 = vector.load %arg3[%c0_5, %c0_6] : memref<1x128xf32, #tpu.memory_space<vmem>>, vector<1x128xf32>
    %7 = vector.broadcast %6 : vector<1x128xf32> to vector<16x128xf32>
    %8 = arith.addf %5, %7 : vector<16x128xf32>
    %9 = vector.extract_strided_slice %8 {offsets = [0, 0], sizes = [8, 128], strides = [1, 1]} : vector<16x128xf32> to vector<8x128xf32>
    %cst_7 = arith.constant dense<0.000000e+00> : vector<128xf32>
    %10 = vector.multi_reduction <add>, %9, %cst_7 [0] : vector<8x128xf32> to vector<128xf32>
    %11 = vector.shape_cast %10 : vector<128xf32> to vector<1x128xf32>
    %cst_8 = arith.constant 8.000000e+00 : f32
    %12 = vector.broadcast %cst_8 : f32 to vector<1x128xf32>
    %13 = arith.divf %11, %12 : vector<1x128xf32>
    %14 = arith.mulf %9, %9 : vector<8x128xf32>
    %cst_9 = arith.constant dense<0.000000e+00> : vector<128xf32>
    %15 = vector.multi_reduction <add>, %14, %cst_9 [0] : vector<8x128xf32> to vector<128xf32>
    %16 = vector.shape_cast %15 : vector<128xf32> to vector<1x128xf32>
    %cst_10 = arith.constant 8.000000e+00 : f32
    %17 = vector.broadcast %cst_10 : f32 to vector<1x128xf32>
    %18 = arith.divf %16, %17 : vector<1x128xf32>
    %19 = arith.mulf %13, %13 : vector<1x128xf32>
    %20 = arith.subf %18, %19 : vector<1x128xf32>
    %cst_11 = arith.constant 0.000000e+00 : f32
    %21 = vector.broadcast %cst_11 : f32 to vector<1x128xf32>
    %22 = arith.maximumf %20, %21 : vector<1x128xf32>
    %23 = vector.broadcast %13 : vector<1x128xf32> to vector<8x128xf32>
    %24 = arith.subf %9, %23 : vector<8x128xf32>
    %cst_12 = arith.constant 9.99999974E-6 : f32
    %25 = vector.broadcast %cst_12 : f32 to vector<1x128xf32>
    %26 = arith.addf %22, %25 : vector<1x128xf32>
    %27 = math.rsqrt %26 : vector<1x128xf32>
    %28 = vector.broadcast %27 : vector<1x128xf32> to vector<8x128xf32>
    %29 = arith.mulf %24, %28 : vector<8x128xf32>
    %cst_13 = arith.constant 0.000000e+00 : f32
    %30 = vector.broadcast %cst_13 : f32 to vector<8x128xf32>
    %31 = arith.maximumf %29, %30 : vector<8x128xf32>
    %32 = vector.extract_strided_slice %8 {offsets = [8, 0], sizes = [8, 128], strides = [1, 1]} : vector<16x128xf32> to vector<8x128xf32>
    %cst_14 = arith.constant dense<0.000000e+00> : vector<128xf32>
    %33 = vector.multi_reduction <add>, %32, %cst_14 [0] : vector<8x128xf32> to vector<128xf32>
    %34 = vector.shape_cast %33 : vector<128xf32> to vector<1x128xf32>
    %cst_15 = arith.constant 8.000000e+00 : f32
    %35 = vector.broadcast %cst_15 : f32 to vector<1x128xf32>
    %36 = arith.divf %34, %35 : vector<1x128xf32>
    %37 = arith.mulf %32, %32 : vector<8x128xf32>
    %cst_16 = arith.constant dense<0.000000e+00> : vector<128xf32>
    %38 = vector.multi_reduction <add>, %37, %cst_16 [0] : vector<8x128xf32> to vector<128xf32>
    %39 = vector.shape_cast %38 : vector<128xf32> to vector<1x128xf32>
    %cst_17 = arith.constant 8.000000e+00 : f32
    %40 = vector.broadcast %cst_17 : f32 to vector<1x128xf32>
    %41 = arith.divf %39, %40 : vector<1x128xf32>
    %42 = arith.mulf %36, %36 : vector<1x128xf32>
    %43 = arith.subf %41, %42 : vector<1x128xf32>
    %cst_18 = arith.constant 0.000000e+00 : f32
    %44 = vector.broadcast %cst_18 : f32 to vector<1x128xf32>
    %45 = arith.maximumf %43, %44 : vector<1x128xf32>
    %46 = vector.broadcast %36 : vector<1x128xf32> to vector<8x128xf32>
    %47 = arith.subf %32, %46 : vector<8x128xf32>
    %cst_19 = arith.constant 9.99999974E-6 : f32
    %48 = vector.broadcast %cst_19 : f32 to vector<1x128xf32>
    %49 = arith.addf %45, %48 : vector<1x128xf32>
    %50 = math.rsqrt %49 : vector<1x128xf32>
    %51 = vector.broadcast %50 : vector<1x128xf32> to vector<8x128xf32>
    %52 = arith.mulf %47, %51 : vector<8x128xf32>
    %cst_20 = arith.constant 0.000000e+00 : f32
    %53 = vector.broadcast %cst_20 : f32 to vector<8x128xf32>
    %54 = arith.maximumf %52, %53 : vector<8x128xf32>
    %55 = tpu.concatenate %31, %54 in 0 : vector<8x128xf32>, vector<8x128xf32> -> vector<16x128xf32>
    %56 = arith.truncf %55 : vector<16x128xf32> to vector<16x128xbf16>
    %c0_21 = arith.constant 0 : index
    %c0_22 = arith.constant 0 : index
    %57 = vector.load %arg4[%c0_21, %c0_22] : memref<128x128xbf16, #tpu.memory_space<vmem>>, vector<128x128xbf16>
    %cst_23 = arith.constant dense<0.000000e+00> : vector<16x128xf32>
    %58 = tpu.matmul %56, %57, %cst_23 {dimension_numbers = #tpu.dot_dimension_numbers<[1], [0], [0], [1], [0, 0, 1, 1], [], []>} : vector<16x128xbf16>, vector<128x128xbf16>, vector<16x128xf32> -> vector<16x128xf32>
    %c0_24 = arith.constant 0 : index
    %c0_25 = arith.constant 0 : index
    %59 = vector.load %arg5[%c0_24, %c0_25] : memref<1x128xf32, #tpu.memory_space<vmem>>, vector<1x128xf32>
    %60 = vector.broadcast %59 : vector<1x128xf32> to vector<16x128xf32>
    %61 = arith.addf %58, %60 : vector<16x128xf32>
    %62 = vector.extract_strided_slice %61 {offsets = [0, 0], sizes = [8, 128], strides = [1, 1]} : vector<16x128xf32> to vector<8x128xf32>
    %63 = vector.extract_strided_slice %61 {offsets = [8, 0], sizes = [8, 128], strides = [1, 1]} : vector<16x128xf32> to vector<8x128xf32>
    %c0_26 = arith.constant 0 : index
    %c0_27 = arith.constant 0 : index
    %64 = vector.load %arg7[%c0_26, %c0_27] : memref<8x128xf32, #tpu.memory_space<vmem>>, vector<8x128xf32>
    tpu.vector_store %arg7[%c0_26, %c0_27], %62 {strides = array<i32>} : memref<8x128xf32, #tpu.memory_space<vmem>>, vector<8x128xf32>,
    %c0_28 = arith.constant 0 : index
    %c0_29 = arith.constant 0 : index
    %65 = vector.load %arg8[%c0_28, %c0_29] : memref<8x128xf32, #tpu.memory_space<vmem>>, vector<8x128xf32>
    tpu.vector_store %arg8[%c0_28, %c0_29], %63 {strides = array<i32>} : memref<8x128xf32, #tpu.memory_space<vmem>>, vector<8x128xf32>,
    %cst_30 = arith.constant dense<0.000000e+00> : vector<128xf32>
    %66 = vector.multi_reduction <add>, %62, %cst_30 [0] : vector<8x128xf32> to vector<128xf32>
    %67 = vector.shape_cast %66 : vector<128xf32> to vector<1x128xf32>
    %cst_31 = arith.constant 8.000000e+00 : f32
    %68 = vector.broadcast %cst_31 : f32 to vector<1x128xf32>
    %69 = arith.divf %67, %68 : vector<1x128xf32>
    %70 = arith.mulf %62, %62 : vector<8x128xf32>
    %cst_32 = arith.constant dense<0.000000e+00> : vector<128xf32>
    %71 = vector.multi_reduction <add>, %70, %cst_32 [0] : vector<8x128xf32> to vector<128xf32>
    %72 = vector.shape_cast %71 : vector<128xf32> to vector<1x128xf32>
    %cst_33 = arith.constant 8.000000e+00 : f32
    %73 = vector.broadcast %cst_33 : f32 to vector<1x128xf32>
    %74 = arith.divf %72, %73 : vector<1x128xf32>
    %75 = arith.mulf %69, %69 : vector<1x128xf32>
    %76 = arith.subf %74, %75 : vector<1x128xf32>
    %cst_34 = arith.constant 0.000000e+00 : f32
    %77 = vector.broadcast %cst_34 : f32 to vector<1x128xf32>
    %78 = arith.maximumf %76, %77 : vector<1x128xf32>
    %79 = vector.broadcast %69 : vector<1x128xf32> to vector<8x128xf32>
    %80 = arith.subf %62, %79 : vector<8x128xf32>
    %cst_35 = arith.constant 9.99999974E-6 : f32
    %81 = vector.broadcast %cst_35 : f32 to vector<1x128xf32>
    %82 = arith.addf %78, %81 : vector<1x128xf32>
    %83 = math.rsqrt %82 : vector<1x128xf32>
    %84 = vector.broadcast %83 : vector<1x128xf32> to vector<8x128xf32>
    %85 = arith.mulf %80, %84 : vector<8x128xf32>
    %86 = arith.truncf %85 : vector<8x128xf32> to vector<8x128xbf16>
    %cst_36 = arith.constant dense<0.000000e+00> : vector<128xf32>
    %87 = vector.multi_reduction <add>, %63, %cst_36 [0] : vector<8x128xf32> to vector<128xf32>
    %88 = vector.shape_cast %87 : vector<128xf32> to vector<1x128xf32>
    %cst_37 = arith.constant 8.000000e+00 : f32
    %89 = vector.broadcast %cst_37 : f32 to vector<1x128xf32>
    %90 = arith.divf %88, %89 : vector<1x128xf32>
    %91 = arith.mulf %63, %63 : vector<8x128xf32>
    %cst_38 = arith.constant dense<0.000000e+00> : vector<128xf32>
    %92 = vector.multi_reduction <add>, %91, %cst_38 [0] : vector<8x128xf32> to vector<128xf32>
    %93 = vector.shape_cast %92 : vector<128xf32> to vector<1x128xf32>
    %cst_39 = arith.constant 8.000000e+00 : f32
    %94 = vector.broadcast %cst_39 : f32 to vector<1x128xf32>
    %95 = arith.divf %93, %94 : vector<1x128xf32>
    %96 = arith.mulf %90, %90 : vector<1x128xf32>
    %97 = arith.subf %95, %96 : vector<1x128xf32>
    %cst_40 = arith.constant 0.000000e+00 : f32
    %98 = vector.broadcast %cst_40 : f32 to vector<1x128xf32>
    %99 = arith.maximumf %97, %98 : vector<1x128xf32>
    %100 = vector.broadcast %90 : vector<1x128xf32> to vector<8x128xf32>
    %101 = arith.subf %63, %100 : vector<8x128xf32>
    %cst_41 = arith.constant 9.99999974E-6 : f32
    %102 = vector.broadcast %cst_41 : f32 to vector<1x128xf32>
    %103 = arith.addf %99, %102 : vector<1x128xf32>
    %104 = math.rsqrt %103 : vector<1x128xf32>
    %105 = vector.broadcast %104 : vector<1x128xf32> to vector<8x128xf32>
    %106 = arith.mulf %101, %105 : vector<8x128xf32>
    %107 = arith.truncf %106 : vector<8x128xf32> to vector<8x128xbf16>
    %cst_42 = arith.constant dense<0.000000e+00> : vector<128x128xf32>
    %108 = tpu.matmul %86, %107, %cst_42 {dimension_numbers = #tpu.dot_dimension_numbers<[0], [0], [1], [1], [0, 1, 1, 1], [], []>} : vector<8x128xbf16>, vector<8x128xbf16>, vector<128x128xf32> -> vector<128x128xf32>
    %cst_43 = arith.constant 1.250000e-01 : f32
    %109 = vector.broadcast %cst_43 : f32 to vector<128x128xf32>
    %110 = arith.mulf %108, %109 : vector<128x128xf32>
    %111 = tpu.iota {dimensions = array<i32: 0>} : vector<128x128xi32>
    %112 = tpu.iota {dimensions = array<i32: 1>} : vector<128x128xi32>
    %113 = arith.cmpi eq, %111, %112 : vector<128x128xi32>
    %cst_44 = arith.constant 1.000000e+00 : f32
    %114 = vector.broadcast %cst_44 : f32 to vector<128x128xf32>
    %115 = arith.subf %110, %114 : vector<128x128xf32>
    %116 = arith.mulf %115, %115 : vector<128x128xf32>
    %cst_45 = arith.constant 0.000000e+00 : f32
    %117 = vector.broadcast %cst_45 : f32 to vector<128x128xf32>
    %118 = arith.select %113, %116, %117 : vector<128x128xi1>, vector<128x128xf32>
    %119 = vector.shape_cast %118 : vector<128x128xf32> to vector<1x128x128xf32>
    %cst_46 = arith.constant dense<0.000000e+00> : vector<1xf32>
    %120 = vector.multi_reduction <add>, %119, %cst_46 [1, 2] : vector<1x128x128xf32> to vector<1xf32>
    %121 = vector.shape_cast %120 : vector<1xf32> to vector<1x1x1xf32>
    %122 = vector.extract %121[0, 0, 0] : f32 from vector<1x1x1xf32>
    %123 = arith.mulf %110, %110 : vector<128x128xf32>
    %cst_47 = arith.constant 0.000000e+00 : f32
    %124 = vector.broadcast %cst_47 : f32 to vector<128x128xf32>
    %125 = arith.select %113, %124, %123 : vector<128x128xi1>, vector<128x128xf32>
    %126 = vector.shape_cast %125 : vector<128x128xf32> to vector<1x128x128xf32>
    %cst_48 = arith.constant dense<0.000000e+00> : vector<1xf32>
    %127 = vector.multi_reduction <add>, %126, %cst_48 [1, 2] : vector<1x128x128xf32> to vector<1xf32>
    %128 = vector.shape_cast %127 : vector<1xf32> to vector<1x1x1xf32>
    %129 = vector.extract %128[0, 0, 0] : f32 from vector<1x1x1xf32>
    %cst_49 = arith.constant 5.000000e-03 : f32
    %130 = arith.mulf %cst_49, %129 : f32
    %131 = arith.addf %122, %130 : f32
    %c0_50 = arith.constant 0 : index
    %132 = memref.load %arg6[%c0_50] : memref<3xf32, #tpu.memory_space<smem>>
    memref.store %131, %arg6[%c0_50] : memref<3xf32, #tpu.memory_space<smem>>
    %c1 = arith.constant 1 : index
    %133 = memref.load %arg6[%c1] : memref<3xf32, #tpu.memory_space<smem>>
    memref.store %122, %arg6[%c1] : memref<3xf32, #tpu.memory_space<smem>>
    %cst_51 = arith.constant 5.000000e-03 : f32
    %134 = arith.mulf %cst_51, %129 : f32
    %c2 = arith.constant 2 : index
    %135 = memref.load %arg6[%c2] : memref<3xf32, #tpu.memory_space<smem>>
    memref.store %134, %arg6[%c2] : memref<3xf32, #tpu.memory_space<smem>>
    return
  }
}

</mosaic_0001>

<llo_original>
// kernel: tpu_custom_call.1
$region0: #{tpu_custom_call.1}
  #allocation0 [shape = 'u32[]', space=smem, size = 0x4, offset = 0x4, fixed_abs, tag = 'smem constant byte address 0x4 - core index']
  #allocation1 [shape = 'u32[72,128]{1,0:T(1,128)}', space=vmem, size = 0x9000, scoped, tag = 'internal scratch']
  %s0 = inlined_call_operand.hbm [shape: f32[8,128], index: 0, kind: input, shape index: {}]
  %s1 = inlined_call_operand.hbm [shape: f32[8,128], index: 1, kind: input, shape index: {}]
  %s2 = inlined_call_operand.hbm [shape: bf16[128,128], index: 2, kind: input, shape index: {}]
  %s3 = inlined_call_operand.vmem [shape: f32[1,128], index: 3, kind: input, shape index: {}]
  %s4 = inlined_call_operand.hbm [shape: bf16[128,128], index: 4, kind: input, shape index: {}]
  %s5 = inlined_call_operand.vmem [shape: f32[1,128], index: 5, kind: input, shape index: {}]
  %s6 = inlined_call_operand.hbm [shape: f32[3], index: 6, kind: output, shape index: {0}]
  %s7 = inlined_call_operand.hbm [shape: f32[8,128], index: 7, kind: output, shape index: {1}]
  %s8 = inlined_call_operand.hbm [shape: f32[8,128], index: 8, kind: output, shape index: {2}]
  %9 = xla_tuple %s6, %s7, %s8
  %s10 = sld [smem:[#allocation0]]
  $region66: #{tpu_custom_call.1} parent=0
    _
  %s12 = ssub.s32 1, %s10
  %s13 = scalar_select 0, %s12, %s10
  $region1: #{tpu_custom_call.1} parent=0
    #allocation2 [shape = 'u8[4096]{0}', space=vmem, size = 0x1000, scoped, tag = 'input window, operand 0, single buffered']
    #allocation3 [shape = 's32[1]{0}', space=sflag, size = 0x4, scoped, tag = 'scoped memory for tpu_custom_call.1']
    #allocation4 [shape = 's32[1]{0}', space=sflag, size = 0x4, scoped, tag = 'scoped memory for tpu_custom_call.1']
    #allocation5 [shape = 's32[1]{0}', space=sflag, size = 0x4, scoped, tag = 'scoped memory for tpu_custom_call.1']
    #allocation6 [shape = 'u8[4096]{0}', space=vmem, size = 0x1000, scoped, tag = 'input window, operand 1, single buffered']
    #allocation7 [shape = 's32[1]{0}', space=sflag, size = 0x4, scoped, tag = 'scoped memory for tpu_custom_call.1']
    #allocation8 [shape = 'u8[32768]{0}', space=vmem, size = 0x8000, scoped, tag = 'input window, operand 2, single buffered']
    #allocation9 [shape = 'u8[32768]{0}', space=vmem, size = 0x8000, scoped, tag = 'input window, operand 4, single buffered']
    #allocation10 [shape = 's32[1]{0}', space=sflag, size = 0x4, scoped, tag = 'scoped memory for tpu_custom_call.1']
    #allocation11 [shape = 'u8[512]{0}', space=smem, size = 0x200, scoped, tag = 'output window, operand 0, single buffered']
    #allocation12 [shape = 'u8[4096]{0}', space=vmem, size = 0x1000, scoped, tag = 'output window, operand 1, single buffered']
    #allocation13 [shape = 'u8[4096]{0}', space=vmem, size = 0x1000, scoped, tag = 'output window, operand 2, single buffered']
    #allocation14 [shape = 's32[1]{0}', space=sflag, size = 0x4, scoped, tag = 'scoped memory for tpu_custom_call.1']
    %14 = vsyncpa [#allocation3], 0
    %15 = vsyncpa [#allocation7], 0
    %16 = vsyncpa [#allocation10], 0
    %17 = vsyncpa [#allocation5], 0
    %18 = vsyncpa [#allocation4], 0
    %19 = vsyncpa [#allocation14], 0
    // Predicated region
    $region2: #{tpu_custom_call.1} parent=1 // pred_check
      _
    $region3: #{tpu_custom_call.1} parent=1 // pred_check_branch
      %21 = sbr.rel (0) target = $region5
    $region4: #{tpu_custom_call.1} parent=1 // pred_region
      %23 = vsyncadd [#allocation3], 0
      %s25 = sshll.u32 %s0, 4
      %s26 = int_to_ptr.hbm [resolvable:$true] %s25
      %s27 = sshll.u32 [#allocation2], 4
      %s28 = int_to_ptr.vmem [resolvable:$true] %s27
      %30 = dma.hbm_to_vmem [thread:$0]  %s26, 128, %s28, [#allocation3]
    $region5: #{tpu_custom_call.1} parent=1 // pred_fallthru
      _
    // Predicated region
    $region6: #{tpu_custom_call.1} parent=1 // pred_check
      _
    $region7: #{tpu_custom_call.1} parent=1 // pred_check_branch
      %32 = sbr.rel (0) target = $region9
    $region8: #{tpu_custom_call.1} parent=1 // pred_region
      %34 = vsyncadd [#allocation7], 0
      %s36 = sshll.u32 %s1, 4
      %s37 = int_to_ptr.hbm [resolvable:$true] %s36
      %s38 = sshll.u32 [#allocation6], 4
      %s39 = int_to_ptr.vmem [resolvable:$true] %s38
      %41 = dma.hbm_to_vmem [thread:$0]  %s37, 128, %s39, [#allocation7]
    $region9: #{tpu_custom_call.1} parent=1 // pred_fallthru
      _
    // Predicated region
    $region10: #{tpu_custom_call.1} parent=1 // pred_check
      _
    $region11: #{tpu_custom_call.1} parent=1 // pred_check_branch
      %43 = sbr.rel (0) target = $region13
    $region12: #{tpu_custom_call.1} parent=1 // pred_region
      %45 = vsyncadd [#allocation7], 0
      %s46 = sshll.u32 %s2, 4
      %s47 = int_to_ptr.hbm [resolvable:$true] %s46
      %s48 = sshll.u32 [#allocation8], 4
      %s49 = int_to_ptr.vmem [resolvable:$true] %s48
      %54 = dma.hbm_to_vmem [thread:$0]  %s47, 1024, %s49, [#allocation7], 64, 64, 4
    $region13: #{tpu_custom_call.1} parent=1 // pred_fallthru
      _
    // Predicated region
    $region14: #{tpu_custom_call.1} parent=1 // pred_check
      _
    $region15: #{tpu_custom_call.1} parent=1 // pred_check_branch
      %56 = sbr.rel (0) target = $region17
    $region16: #{tpu_custom_call.1} parent=1 // pred_region
      _
    $region17: #{tpu_custom_call.1} parent=1 // pred_fallthru
      _
    // Predicated region
    $region18: #{tpu_custom_call.1} parent=1 // pred_check
      _
    $region19: #{tpu_custom_call.1} parent=1 // pred_check_branch
      %58 = sbr.rel (0) target = $region21
    $region20: #{tpu_custom_call.1} parent=1 // pred_region
      %60 = vsyncadd [#allocation10], 0
      %s61 = sshll.u32 %s4, 4
      %s62 = int_to_ptr.hbm [resolvable:$true] %s61
      %s63 = sshll.u32 [#allocation9], 4
      %s64 = int_to_ptr.vmem [resolvable:$true] %s63
      %69 = dma.hbm_to_vmem [thread:$0]  %s62, 1024, %s64, [#allocation10], 64, 64, 4
    $region21: #{tpu_custom_call.1} parent=1 // pred_fallthru
      _
    // Predicated region
    $region22: #{tpu_custom_call.1} parent=1 // pred_check
      _
    $region23: #{tpu_custom_call.1} parent=1 // pred_check_branch
      %71 = sbr.rel (0) target = $region25
    $region24: #{tpu_custom_call.1} parent=1 // pred_region
      _
    $region25: #{tpu_custom_call.1} parent=1 // pred_fallthru
      _
    // Predicated region
    $region26: #{tpu_custom_call.1} parent=1 // pred_check
      _
    $region27: #{tpu_custom_call.1} parent=1 // pred_check_branch
      %73 = sbr.rel (0) target = $region29
    $region28: #{tpu_custom_call.1} parent=1 // pred_region
      %75 = dma.done [#allocation3], 128
    $region29: #{tpu_custom_call.1} parent=1 // pred_fallthru
      _
    // Predicated region
    $region30: #{tpu_custom_call.1} parent=1 // pred_check
      _
    $region31: #{tpu_custom_call.1} parent=1 // pred_check_branch
      %77 = sbr.rel (0) target = $region33
    $region32: #{tpu_custom_call.1} parent=1 // pred_region
      %79 = dma.done [#allocation7], 128
    $region33: #{tpu_custom_call.1} parent=1 // pred_fallthru
      _
    // Predicated region
    $region34: #{tpu_custom_call.1} parent=1 // pred_check
      _
    $region35: #{tpu_custom_call.1} parent=1 // pred_check_branch
      %81 = sbr.rel (0) target = $region37
    $region36: #{tpu_custom_call.1} parent=1 // pred_region
      %83 = dma.done [#allocation7], 1024
    $region37: #{tpu_custom_call.1} parent=1 // pred_fallthru
      _
    // Predicated region
    $region38: #{tpu_custom_call.1} parent=1 // pred_check
      _
    $region39: #{tpu_custom_call.1} parent=1 // pred_check_branch
      %85 = sbr.rel (0) target = $region41
    $region40: #{tpu_custom_call.1} parent=1 // pred_region
      %87 = dma.done [#allocation10], 1024
    $region41: #{tpu_custom_call.1} parent=1 // pred_fallthru
      _
    %v89 = vld [vmem:[#allocation2] sm:$0xff]
    %v90 = vld [vmem:[#allocation6] sm:$0xff]
    %v91 = vpack.c.bf16 %v90, %v89
    %v92 = vld [vmem:[#allocation8] sm:$0xf]
    %v93 = vld [vmem:[#allocation8 + $0x4] sm:$0xf]
    %v94 = vld [vmem:[#allocation8 + $0x8] sm:$0xf]
    %v95 = vld [vmem:[#allocation8 + $0xc] sm:$0xf]
    %v96 = vld [vmem:[#allocation8 + $0x10] sm:$0xf]
    %v97 = vld [vmem:[#allocation8 + $0x14] sm:$0xf]
    %v98 = vld [vmem:[#allocation8 + $0x18] sm:$0xf]
    %v99 = vld [vmem:[#allocation8 + $0x1c] sm:$0xf]
    %v100 = vld [vmem:[#allocation8 + $0x20] sm:$0xf]
    %v101 = vld [vmem:[#allocation8 + $0x24] sm:$0xf]
    %v102 = vld [vmem:[#allocation8 + $0x28] sm:$0xf]
    %v103 = vld [vmem:[#allocation8 + $0x2c] sm:$0xf]
    %v104 = vld [vmem:[#allocation8 + $0x30] sm:$0xf]
    %v105 = vld [vmem:[#allocation8 + $0x34] sm:$0xf]
    %v106 = vld [vmem:[#allocation8 + $0x38] sm:$0xf]
    %v107 = vld [vmem:[#allocation8 + $0x3c] sm:$0xf]
    %v108 = vld [vmem:[%s3] sm:$0x1]
    %v110 = vperm.slane %v108, 0
    %v128 = vunpack.c.l.b16 %v92
    %v129 = vunpack.c.l.b16 %v93
    %v130 = vunpack.c.l.b16 %v94
    %v131 = vunpack.c.l.b16 %v95
    %v132 = vunpack.c.l.b16 %v96
    %v133 = vunpack.c.l.b16 %v97
    %v134 = vunpack.c.l.b16 %v98
    %v135 = vunpack.c.l.b16 %v99
    %v136 = vunpack.c.l.b16 %v100
    %v137 = vunpack.c.l.b16 %v101
    %v138 = vunpack.c.l.b16 %v102
    %v139 = vunpack.c.l.b16 %v103
    %v140 = vunpack.c.l.b16 %v104
    %v141 = vunpack.c.l.b16 %v105
    %v142 = vunpack.c.l.b16 %v106
    %v143 = vunpack.c.l.b16 %v107
    %v144 = vpack.c.b16 %v129, %v128
    %v145 = vpack.c.b16 %v131, %v130
    %v146 = vpack.c.b16 %v133, %v132
    %v147 = vpack.c.b16 %v135, %v134
    %v148 = vpack.c.b16 %v137, %v136
    %v149 = vpack.c.b16 %v139, %v138
    %v150 = vpack.c.b16 %v141, %v140
    %v151 = vpack.c.b16 %v143, %v142
    %160 = vmatpush.bf16.msra.mxu0 %v151
    %161 = vmatpush.bf16.msra.mxu0 %v150
    %162 = vmatpush.bf16.msra.mxu0 %v149
    %163 = vmatpush.bf16.msra.mxu0 %v148
    %164 = vmatpush.bf16.msra.mxu0 %v147
    %165 = vmatpush.bf16.msra.mxu0 %v146
    %166 = vmatpush.bf16.msra.mxu0 %v145
    %167 = vmatpush.bf16.msra.mxu0 %v144
    %168 = vmatmul.bf16.gmra.mxu0 %v91
    %v169 = vpop.f32.mrf.mxu0
    %v170 = vadd.f32 %v110, %v169
    %v171 = vpop.f32.mrf.mxu0
    %v172 = vadd.f32 %v110, %v171
    %173 = vdwg.mxu0
    %v174 = vrot.slane %v170, 4
    %v175 = vadd.f32 %v170, %v174
    %v176 = vrot.slane %v175, 2
    %v177 = vadd.f32 %v175, %v176
    %v178 = vrot.slane %v177, 1
    %v179 = vadd.f32 %v177, %v178
    %v180 = vrcp.pop 8.0
    %v181 = vmul.f32 8.0, %v180
    %v182 = vsub.f32 1.0, %v181
    %v183 = vmul.f32 %v180, %v182
    %v184 = vadd.f32 %v180, %v183
    %vm185 = vweird.f32 %v180
    %v186 = vsel %vm185, %v180, %v184
    %v187 = vmul.f32 %v179, %v186
    %v188 = vmul.f32 %v170, %v170
    %v189 = vrot.slane %v188, 4
    %v190 = vadd.f32 %v188, %v189
    %v191 = vrot.slane %v190, 2
    %v192 = vadd.f32 %v190, %v191
    %v193 = vrot.slane %v192, 1
    %v194 = vadd.f32 %v192, %v193
    %v195 = vmul.f32 %v194, %v186
    %v196 = vmul.f32 %v187, %v187
    %v197 = vsub.f32 %v195, %v196
    %v198 = vmax.f32 %v197, 0.0
    %v199 = vsub.f32 %v170, %v187
    %v200 = vadd.f32 %v198, 1e-05
    %v201 = vrsqrt.pop %v200
    %v202 = vmul.f32 %v201, %v200
    %v203 = vmul.f32 %v202, %v201
    %v204 = vmul.f32 0.5, %v203
    %v205 = vsub.f32 1.5, %v204
    %v206 = vmul.f32 %v201, %v205
    %vm207 = vweird.f32 %v200
    %vm208 = vweird.f32 %v201
    %vm209 = vmor %vm207, %vm208
    %v210 = vsel %vm209, %v201, %v206
    %v211 = vmul.f32 %v199, %v210
    %v212 = vmax.f32 %v211, 0.0
    %v213 = vrot.slane %v172, 4
    %v214 = vadd.f32 %v172, %v213
    %v215 = vrot.slane %v214, 2
    %v216 = vadd.f32 %v214, %v215
    %v217 = vrot.slane %v216, 1
    %v218 = vadd.f32 %v216, %v217
    %v219 = vmul.f32 %v218, %v186
    %v220 = vmul.f32 %v172, %v172
    %v221 = vrot.slane %v220, 4
    %v222 = vadd.f32 %v220, %v221
    %v223 = vrot.slane %v222, 2
    %v224 = vadd.f32 %v222, %v223
    %v225 = vrot.slane %v224, 1
    %v226 = vadd.f32 %v224, %v225
    %v227 = vmul.f32 %v226, %v186
    %v228 = vmul.f32 %v219, %v219
    %v229 = vsub.f32 %v227, %v228
    %v230 = vmax.f32 %v229, 0.0
    %v231 = vsub.f32 %v172, %v219
    %v232 = vadd.f32 %v230, 1e-05
    %v233 = vrsqrt.pop %v232
    %v234 = vmul.f32 %v233, %v232
    %v235 = vmul.f32 %v234, %v233
    %v236 = vmul.f32 0.5, %v235
    %v237 = vsub.f32 1.5, %v236
    %v238 = vmul.f32 %v233, %v237
    %vm239 = vweird.f32 %v232
    %vm240 = vweird.f32 %v233
    %vm241 = vmor %vm239, %vm240
    %v242 = vsel %vm241, %v233, %v238
    %v243 = vmul.f32 %v231, %v242
    %v244 = vmax.f32 %v243, 0.0
    %v245 = vpack.c.bf16 %v244, %v212
    %v246 = vld [vmem:[#allocation9] sm:$0xf]
    %v247 = vld [vmem:[#allocation9 + $0x4] sm:$0xf]
    %v248 = vld [vmem:[#allocation9 + $0x8] sm:$0xf]
    %v249 = vld [vmem:[#allocation9 + $0xc] sm:$0xf]
    %v250 = vld [vmem:[#allocation9 + $0x10] sm:$0xf]
    %v251 = vld [vmem:[#allocation9 + $0x14] sm:$0xf]
    %v252 = vld [vmem:[#allocation9 + $0x18] sm:$0xf]
    %v253 = vld [vmem:[#allocation9 + $0x1c] sm:$0xf]
    %v254 = vld [vmem:[#allocation9 + $0x20] sm:$0xf]
    %v255 = vld [vmem:[#allocation9 + $0x24] sm:$0xf]
    %v256 = vld [vmem:[#allocation9 + $0x28] sm:$0xf]
    %v257 = vld [vmem:[#allocation9 + $0x2c] sm:$0xf]
    %v258 = vld [vmem:[#allocation9 + $0x30] sm:$0xf]
    %v259 = vld [vmem:[#allocation9 + $0x34] sm:$0xf]
    %v260 = vld [vmem:[#allocation9 + $0x38] sm:$0xf]
    %v261 = vld [vmem:[#allocation9 + $0x3c] sm:$0xf]
    %v262 = vld [vmem:[%s5] sm:$0x1]
    %v264 = vperm.slane %v262, 0
    %v282 = vunpack.c.l.b16 %v246
    %v283 = vunpack.c.l.b16 %v247
    %v284 = vunpack.c.l.b16 %v248
    %v285 = vunpack.c.l.b16 %v249
    %v286 = vunpack.c.l.b16 %v250
    %v287 = vunpack.c.l.b16 %v251
    %v288 = vunpack.c.l.b16 %v252
    %v289 = vunpack.c.l.b16 %v253
    %v290 = vunpack.c.l.b16 %v254
    %v291 = vunpack.c.l.b16 %v255
    %v292 = vunpack.c.l.b16 %v256
    %v293 = vunpack.c.l.b16 %v257
    %v294 = vunpack.c.l.b16 %v258
    %v295 = vunpack.c.l.b16 %v259
    %v296 = vunpack.c.l.b16 %v260
    %v297 = vunpack.c.l.b16 %v261
    %v298 = vpack.c.b16 %v283, %v282
    %v299 = vpack.c.b16 %v285, %v284
    %v300 = vpack.c.b16 %v287, %v286
    %v301 = vpack.c.b16 %v289, %v288
    %v302 = vpack.c.b16 %v291, %v290
    %v303 = vpack.c.b16 %v293, %v292
    %v304 = vpack.c.b16 %v295, %v294
    %v305 = vpack.c.b16 %v297, %v296
    %314 = vmatpush.bf16.msra.mxu0 %v305
    %315 = vmatpush.bf16.msra.mxu0 %v304
    %316 = vmatpush.bf16.msra.mxu0 %v303
    %317 = vmatpush.bf16.msra.mxu0 %v302
    %318 = vmatpush.bf16.msra.mxu0 %v301
    %319 = vmatpush.bf16.msra.mxu0 %v300
    %320 = vmatpush.bf16.msra.mxu0 %v299
    %321 = vmatpush.bf16.msra.mxu0 %v298
    %322 = vmatmul.bf16.gmra.mxu0 %v245
    %v323 = vpop.f32.mrf.mxu0
    %v324 = vadd.f32 %v264, %v323
    %v325 = vpop.f32.mrf.mxu0
    %v326 = vadd.f32 %v264, %v325
    %327 = vdwg.mxu0
    %328 = vst [vmem:[#allocation12] sm:$0xff] %v324
    %329 = vst [vmem:[#allocation13] sm:$0xff] %v326
    %v330 = vrot.slane %v324, 4
    %v331 = vadd.f32 %v324, %v330
    %v332 = vrot.slane %v331, 2
    %v333 = vadd.f32 %v331, %v332
    %v334 = vrot.slane %v333, 1
    %v335 = vadd.f32 %v333, %v334
    %v336 = vmul.f32 %v335, %v186
    %v337 = vmul.f32 %v324, %v324
    %v338 = vrot.slane %v337, 4
    %v339 = vadd.f32 %v337, %v338
    %v340 = vrot.slane %v339, 2
    %v341 = vadd.f32 %v339, %v340
    %v342 = vrot.slane %v341, 1
    %v343 = vadd.f32 %v341, %v342
    %v344 = vmul.f32 %v343, %v186
    %v345 = vmul.f32 %v336, %v336
    %v346 = vsub.f32 %v344, %v345
    %v347 = vmax.f32 %v346, 0.0
    %v348 = vsub.f32 %v324, %v336
    %v349 = vadd.f32 %v347, 1e-05
    %v350 = vrsqrt.pop %v349
    %v351 = vmul.f32 %v350, %v349
    %v352 = vmul.f32 %v351, %v350
    %v353 = vmul.f32 0.5, %v352
    %v354 = vsub.f32 1.5, %v353
    %v355 = vmul.f32 %v350, %v354
    %vm356 = vweird.f32 %v349
    %vm357 = vweird.f32 %v350
    %vm358 = vmor %vm356, %vm357
    %v359 = vsel %vm358, %v350, %v355
    %v360 = vmul.f32 %v348, %v359
    %v361 = vpack.c.bf16 %v360, %v360
    %v362 = vrot.slane %v326, 4
    %v363 = vadd.f32 %v326, %v362
    %v364 = vrot.slane %v363, 2
    %v365 = vadd.f32 %v363, %v364
    %v366 = vrot.slane %v365, 1
    %v367 = vadd.f32 %v365, %v366
    %v368 = vmul.f32 %v367, %v186
    %v369 = vmul.f32 %v326, %v326
    %v370 = vrot.slane %v369, 4
    %v371 = vadd.f32 %v369, %v370
    %v372 = vrot.slane %v371, 2
    %v373 = vadd.f32 %v371, %v372
    %v374 = vrot.slane %v373, 1
    %v375 = vadd.f32 %v373, %v374
    %v376 = vmul.f32 %v375, %v186
    %v377 = vmul.f32 %v368, %v368
    %v378 = vsub.f32 %v376, %v377
    %v379 = vmax.f32 %v378, 0.0
    %v380 = vsub.f32 %v326, %v368
    %v381 = vadd.f32 %v379, 1e-05
    %v382 = vrsqrt.pop %v381
    %v383 = vmul.f32 %v382, %v381
    %v384 = vmul.f32 %v383, %v382
    %v385 = vmul.f32 0.5, %v384
    %v386 = vsub.f32 1.5, %v385
    %v387 = vmul.f32 %v382, %v386
    %vm388 = vweird.f32 %v381
    %vm389 = vweird.f32 %v382
    %vm390 = vmor %vm388, %vm389
    %v391 = vsel %vm390, %v382, %v387
    %v392 = vmul.f32 %v380, %v391
    %v393 = vpack.c.bf16 %v392, %v392
    %394 = vxpose.xlu0.c.b16.start [1/8] %v361, 128
    %395 = vxpose.xlu0.c.b16.cont [2/8] 0, 128
    %396 = vxpose.xlu0.c.b16.cont [3/8] 0, 128
    %397 = vxpose.xlu0.c.b16.cont [4/8] 0, 128
    %398 = vxpose.xlu0.c.b16.cont [5/8] 0, 128
    %399 = vxpose.xlu0.c.b16.cont [6/8] 0, 128
    %400 = vxpose.xlu0.c.b16.cont [7/8] 0, 128
    %401 = vxpose.xlu0.c.b16.end [8/8] 0, 128
    %v402 = vpop.trf.xlu0
    %v403 = vpop.trf.xlu0
    %v404 = vpop.trf.xlu0
    %v405 = vpop.trf.xlu0
    %v406 = vpop.trf.xlu0
    %v407 = vpop.trf.xlu0
    %v408 = vpop.trf.xlu0
    %v409 = vpop.trf.xlu0
    %vm410 = vcmask 64512
    %v412 = vsel %vm410, %v402, 0
    %v415 = vsel %vm410, %v403, 0
    %v418 = vsel %vm410, %v404, 0
    %v421 = vsel %vm410, %v405, 0
    %v424 = vsel %vm410, %v406, 0
    %v427 = vsel %vm410, %v407, 0
    %v430 = vsel %vm410, %v408, 0
    %v433 = vsel %vm410, %v409, 0
    %vm435 = vcmask 1043456
    %v437 = vsel %vm435, %v393, 0
    %439 = vmatpush.bf16.msra.mxu0 0
    %440 = vmatpush.bf16.msra.mxu0 0
    %441 = vmatpush.bf16.msra.mxu0 0
    %442 = vmatpush.bf16.msra.mxu0 0
    %443 = vmatpush.bf16.msra.mxu0 0
    %444 = vmatpush.bf16.msra.mxu0 0
    %445 = vmatpush.bf16.msra.mxu0 0
    %446 = vmatpush.bf16.msra.mxu0 %v437
    %447 = vmatmul.bf16.gmra.mxu0 %v412
    %v448 = vpop.f32.mrf.mxu0
    %v449 = vadd.f32 0.0, %v448
    %v450 = vpop.f32.mrf.mxu0
    %v451 = vadd.f32 0.0, %v450
    %452 = vmatmul.bf16.gmra.mxu0 %v415
    %v453 = vpop.f32.mrf.mxu0
    %v454 = vadd.f32 0.0, %v453
    %v455 = vpop.f32.mrf.mxu0
    %v456 = vadd.f32 0.0, %v455
    %457 = vmatmul.bf16.gmra.mxu0 %v418
    %v458 = vpop.f32.mrf.mxu0
    %v459 = vadd.f32 0.0, %v458
    %v460 = vpop.f32.mrf.mxu0
    %v461 = vadd.f32 0.0, %v460
    %462 = vmatmul.bf16.gmra.mxu0 %v421
    %v463 = vpop.f32.mrf.mxu0
    %v464 = vadd.f32 0.0, %v463
    %v465 = vpop.f32.mrf.mxu0
    %v466 = vadd.f32 0.0, %v465
    %467 = vmatmul.bf16.gmra.mxu0 %v424
    %v468 = vpop.f32.mrf.mxu0
    %v469 = vadd.f32 0.0, %v468
    %v470 = vpop.f32.mrf.mxu0
    %v471 = vadd.f32 0.0, %v470
    %472 = vmatmul.bf16.gmra.mxu0 %v427
    %v473 = vpop.f32.mrf.mxu0
    %v474 = vadd.f32 0.0, %v473
    %v475 = vpop.f32.mrf.mxu0
    %v476 = vadd.f32 0.0, %v475
    %477 = vmatmul.bf16.gmra.mxu0 %v430
    %v478 = vpop.f32.mrf.mxu0
    %v479 = vadd.f32 0.0, %v478
    %v480 = vpop.f32.mrf.mxu0
    %v481 = vadd.f32 0.0, %v480
    %482 = vmatmul.bf16.gmra.mxu0 %v433
    %v483 = vpop.f32.mrf.mxu0
    %v484 = vadd.f32 0.0, %v483
    %v485 = vpop.f32.mrf.mxu0
    %v486 = vadd.f32 0.0, %v485
    %487 = vdwg.mxu0
    %v488 = vmul.f32 %v449, 0.125
    %v489 = vmul.f32 %v451, 0.125
    %v490 = vmul.f32 %v454, 0.125
    %v491 = vmul.f32 %v456, 0.125
    %v492 = vmul.f32 %v459, 0.125
    %v493 = vmul.f32 %v461, 0.125
    %v494 = vmul.f32 %v464, 0.125
    %v495 = vmul.f32 %v466, 0.125
    %v496 = vmul.f32 %v469, 0.125
    %v497 = vmul.f32 %v471, 0.125
    %v498 = vmul.f32 %v474, 0.125
    %v499 = vmul.f32 %v476, 0.125
    %v500 = vmul.f32 %v479, 0.125
    %v501 = vmul.f32 %v481, 0.125
    %v502 = vmul.f32 %v484, 0.125
    %v503 = vmul.f32 %v486, 0.125
    %v504 = vlaneseq
    %v505 = vshrl.u32 %v504, 7
    %v506 = vadd.s32 %v505, 8
    %v507 = vadd.s32 %v505, 16
    %v508 = vadd.s32 %v505, 24
    %v509 = vadd.s32 %v505, 32
    %v510 = vadd.s32 %v505, 40
    %v511 = vadd.s32 %v505, 48
    %v512 = vadd.s32 %v505, 56
    %v513 = vadd.s32 %v505, 64
    %v514 = vadd.s32 %v505, 72
    %v515 = vadd.s32 %v505, 80
    %v516 = vadd.s32 %v505, 88
    %v517 = vadd.s32 %v505, 96
    %v518 = vadd.s32 %v505, 104
    %v519 = vadd.s32 %v505, 112
    %v520 = vadd.s32 %v505, 120
    %v521 = vlaneseq
    %v522 = vand.u32 %v521, 127
    %vm523 = vcmp.eq.s32.totalorder %v505, %v522
    %vm524 = vcmp.eq.s32.totalorder %v506, %v522
    %vm525 = vcmp.eq.s32.totalorder %v507, %v522
    %vm526 = vcmp.eq.s32.totalorder %v508, %v522
    %vm527 = vcmp.eq.s32.totalorder %v509, %v522
    %vm528 = vcmp.eq.s32.totalorder %v510, %v522
    %vm529 = vcmp.eq.s32.totalorder %v511, %v522
    %vm530 = vcmp.eq.s32.totalorder %v512, %v522
    %vm531 = vcmp.eq.s32.totalorder %v513, %v522
    %vm532 = vcmp.eq.s32.totalorder %v514, %v522
    %vm533 = vcmp.eq.s32.totalorder %v515, %v522
    %vm534 = vcmp.eq.s32.totalorder %v516, %v522
    %vm535 = vcmp.eq.s32.totalorder %v517, %v522
    %vm536 = vcmp.eq.s32.totalorder %v518, %v522
    %vm537 = vcmp.eq.s32.totalorder %v519, %v522
    %vm538 = vcmp.eq.s32.totalorder %v520, %v522
    %v539 = vsub.f32 %v488, 1.0
    %v540 = vsub.f32 %v489, 1.0
    %v541 = vsub.f32 %v490, 1.0
    %v542 = vsub.f32 %v491, 1.0
    %v543 = vsub.f32 %v492, 1.0
    %v544 = vsub.f32 %v493, 1.0
    %v545 = vsub.f32 %v494, 1.0
    %v546 = vsub.f32 %v495, 1.0
    %v547 = vsub.f32 %v496, 1.0
    %v548 = vsub.f32 %v497, 1.0
    %v549 = vsub.f32 %v498, 1.0
    %v550 = vsub.f32 %v499, 1.0
    %v551 = vsub.f32 %v500, 1.0
    %v552 = vsub.f32 %v501, 1.0
    %v553 = vsub.f32 %v502, 1.0
    %v554 = vsub.f32 %v503, 1.0
    %v555 = vmul.f32 %v539, %v539
    %v556 = vmul.f32 %v540, %v540
    %v557 = vmul.f32 %v541, %v541
    %v558 = vmul.f32 %v542, %v542
    %v559 = vmul.f32 %v543, %v543
    %v560 = vmul.f32 %v544, %v544
    %v561 = vmul.f32 %v545, %v545
    %v562 = vmul.f32 %v546, %v546
    %v563 = vmul.f32 %v547, %v547
    %v564 = vmul.f32 %v548, %v548
    %v565 = vmul.f32 %v549, %v549
    %v566 = vmul.f32 %v550, %v550
    %v567 = vmul.f32 %v551, %v551
    %v568 = vmul.f32 %v552, %v552
    %v569 = vmul.f32 %v553, %v553
    %v570 = vmul.f32 %v554, %v554
    %v571 = vsel %vm523, %v555, 0.0
    %v572 = vsel %vm524, %v556, 0.0
    %v573 = vsel %vm525, %v557, 0.0
    %v574 = vsel %vm526, %v558, 0.0
    %v575 = vsel %vm527, %v559, 0.0
    %v576 = vsel %vm528, %v560, 0.0
    %v577 = vsel %vm529, %v561, 0.0
    %v578 = vsel %vm530, %v562, 0.0
    %v579 = vsel %vm531, %v563, 0.0
    %v580 = vsel %vm532, %v564, 0.0
    %v581 = vsel %vm533, %v565, 0.0
    %v582 = vsel %vm534, %v566, 0.0
    %v583 = vsel %vm535, %v567, 0.0
    %v584 = vsel %vm536, %v568, 0.0
    %v585 = vsel %vm537, %v569, 0.0
    %v586 = vsel %vm538, %v570, 0.0
    %v587 = vadd.f32 %v571, %v572
    %v588 = vadd.f32 %v587, %v573
    %v589 = vadd.f32 %v588, %v574
    %v590 = vadd.f32 %v589, %v575
    %v591 = vadd.f32 %v590, %v576
    %v592 = vadd.f32 %v591, %v577
    %v593 = vadd.f32 %v592, %v578
    %v594 = vadd.f32 %v593, %v579
    %v595 = vadd.f32 %v594, %v580
    %v596 = vadd.f32 %v595, %v581
    %v597 = vadd.f32 %v596, %v582
    %v598 = vadd.f32 %v597, %v583
    %v599 = vadd.f32 %v598, %v584
    %v600 = vadd.f32 %v599, %v585
    %v601 = vadd.f32 %v600, %v586
    %602 = vadd.xlane.f32.xlu0 %v601
    %v603 = vpop.xlane.xlu0 %602
    %v604 = vrot.slane %v603, 4
    %v605 = vadd.f32 %v603, %v604
    %v606 = vrot.slane %v605, 2
    %v607 = vadd.f32 %v605, %v606
    %v608 = vrot.slane %v607, 1
    %v609 = vadd.f32 %v607, %v608
    %s610 = vtos %v609
    %v611 = vmul.f32 %v488, %v488
    %v612 = vmul.f32 %v489, %v489
    %v613 = vmul.f32 %v490, %v490
    %v614 = vmul.f32 %v491, %v491
    %v615 = vmul.f32 %v492, %v492
    %v616 = vmul.f32 %v493, %v493
    %v617 = vmul.f32 %v494, %v494
    %v618 = vmul.f32 %v495, %v495
    %v619 = vmul.f32 %v496, %v496
    %v620 = vmul.f32 %v497, %v497
    %v621 = vmul.f32 %v498, %v498
    %v622 = vmul.f32 %v499, %v499
    %v623 = vmul.f32 %v500, %v500
    %v624 = vmul.f32 %v501, %v501
    %v625 = vmul.f32 %v502, %v502
    %v626 = vmul.f32 %v503, %v503
    %v627 = vsel %vm523, 0.0, %v611
    %v628 = vsel %vm524, 0.0, %v612
    %v629 = vsel %vm525, 0.0, %v613
    %v630 = vsel %vm526, 0.0, %v614
    %v631 = vsel %vm527, 0.0, %v615
    %v632 = vsel %vm528, 0.0, %v616
    %v633 = vsel %vm529, 0.0, %v617
    %v634 = vsel %vm530, 0.0, %v618
    %v635 = vsel %vm531, 0.0, %v619
    %v636 = vsel %vm532, 0.0, %v620
    %v637 = vsel %vm533, 0.0, %v621
    %v638 = vsel %vm534, 0.0, %v622
    %v639 = vsel %vm535, 0.0, %v623
    %v640 = vsel %vm536, 0.0, %v624
    %v641 = vsel %vm537, 0.0, %v625
    %v642 = vsel %vm538, 0.0, %v626
    %v643 = vadd.f32 %v627, %v628
    %v644 = vadd.f32 %v643, %v629
    %v645 = vadd.f32 %v644, %v630
    %v646 = vadd.f32 %v645, %v631
    %v647 = vadd.f32 %v646, %v632
    %v648 = vadd.f32 %v647, %v633
    %v649 = vadd.f32 %v648, %v634
    %v650 = vadd.f32 %v649, %v635
    %v651 = vadd.f32 %v650, %v636
    %v652 = vadd.f32 %v651, %v637
    %v653 = vadd.f32 %v652, %v638
    %v654 = vadd.f32 %v653, %v639
    %v655 = vadd.f32 %v654, %v640
    %v656 = vadd.f32 %v655, %v641
    %v657 = vadd.f32 %v656, %v642
    %658 = vadd.xlane.f32.xlu0 %v657
    %v659 = vpop.xlane.xlu0 %658
    %v660 = vrot.slane %v659, 4
    %v661 = vadd.f32 %v659, %v660
    %v662 = vrot.slane %v661, 2
    %v663 = vadd.f32 %v661, %v662
    %v664 = vrot.slane %v663, 1
    %v665 = vadd.f32 %v663, %v664
    %s666 = vtos %v665
    %s667 = smul.f32 %s666, 0.005
    %s668 = sadd.f32 %s610, %s667
    %s669 = scalar_lea.smem [#allocation11], 0
    %670 = sst [smem:[%s669]] %s668
    %s671 = scalar_lea.smem [#allocation11], 1
    %672 = sst [smem:[%s671]] %s610
    %s673 = scalar_lea.smem [#allocation11], 2
    %674 = sst [smem:[%s673]] %s667
    // Predicated region
    $region42: #{tpu_custom_call.1} parent=1 // pred_check
      _
    $region43: #{tpu_custom_call.1} parent=1 // pred_check_branch
      %676 = sbr.rel (0) target = $region45
    $region44: #{tpu_custom_call.1} parent=1 // pred_region
      %678 = vsyncadd [#allocation5], 0
      %s680 = sshll.u32 %s6, 4
      %s681 = int_to_ptr.hbm [resolvable:$true] %s680
      %683 = dma.smem_to_hbm [#allocation11], 16, %s681, [#allocation5]
    $region45: #{tpu_custom_call.1} parent=1 // pred_fallthru
      _
    // Predicated region
    $region46: #{tpu_custom_call.1} parent=1 // pred_check
      _
    $region47: #{tpu_custom_call.1} parent=1 // pred_check_branch
      %685 = sbr.rel (0) target = $region49
    $region48: #{tpu_custom_call.1} parent=1 // pred_region
      %687 = vsyncadd [#allocation4], 0
      %s689 = sshll.u32 [#allocation12], 4
      %s690 = int_to_ptr.vmem [resolvable:$true] %s689
      %s691 = sshll.u32 %s7, 4
      %s692 = int_to_ptr.hbm [resolvable:$true] %s691
      %694 = dma.vmem_to_hbm [thread:$0]  %s690, 128, %s692, [#allocation4]
    $region49: #{tpu_custom_call.1} parent=1 // pred_fallthru
      _
    // Predicated region
    $region50: #{tpu_custom_call.1} parent=1 // pred_check
      _
    $region51: #{tpu_custom_call.1} parent=1 // pred_check_branch
      %696 = sbr.rel (0) target = $region53
    $region52: #{tpu_custom_call.1} parent=1 // pred_region
      %698 = vsyncadd [#allocation14], 0
      %s700 = sshll.u32 [#allocation13], 4
      %s701 = int_to_ptr.vmem [resolvable:$true] %s700
      %s702 = sshll.u32 %s8, 4
      %s703 = int_to_ptr.hbm [resolvable:$true] %s702
      %705 = dma.vmem_to_hbm [thread:$0]  %s701, 128, %s703, [#allocation14]
    $region53: #{tpu_custom_call.1} parent=1 // pred_fallthru
      _
    // Predicated region
    $region54: #{tpu_custom_call.1} parent=1 // pred_check
      _
    $region55: #{tpu_custom_call.1} parent=1 // pred_check_branch
      %707 = sbr.rel (0) target = $region57
    $region56: #{tpu_custom_call.1} parent=1 // pred_region
      %709 = dma.done [#allocation5], 16
    $region57: #{tpu_custom_call.1} parent=1 // pred_fallthru
      _
    // Predicated region
    $region58: #{tpu_custom_call.1} parent=1 // pred_check
      _
    $region59: #{tpu_custom_call.1} parent=1 // pred_check_branch
      %711 = sbr.rel (0) target = $region61
    $region60: #{tpu_custom_call.1} parent=1 // pred_region
      %713 = dma.done [#allocation4], 128
    $region61: #{tpu_custom_call.1} parent=1 // pred_fallthru
      _
    // Predicated region
    $region62: #{tpu_custom_call.1} parent=1 // pred_check
      _
    $region63: #{tpu_custom_call.1} parent=1 // pred_check_branch
      %715 = sbr.rel (0) target = $region65
    $region64: #{tpu_custom_call.1} parent=1 // pred_region
      %717 = dma.done [#allocation14], 128
    $region65: #{tpu_custom_call.1} parent=1 // pred_fallthru
      _
    %718 = sfence
    %719 = vsyncpa [#allocation3], 1
    %720 = vsyncpa [#allocation7], 1
    %721 = vsyncpa [#allocation10], 1
    %722 = vsyncpa [#allocation4], 1
    %723 = vsyncpa [#allocation14], 1
    %724 = vsyncpa [#allocation5], 1

</llo_original>
